<compile_context>
chip_gen: v6e
topology: v6e:2x2x1
jax: 0.10.0
libtpu: 0.0.40
codegen_flags: <defaults>
</compile_context>

<pallas_src>
import functools

import jax
import jax.numpy as jnp
from jax import lax
from jax.experimental import pallas as pl
from jax.experimental.pallas import tpu as pltpu

EPS = 1e-8


def _round_up(x, m):
    return ((x + m - 1) // m) * m


def _pairwise_cos_loss_kernel(a_ref, neg_ref, out_ref,
                              colsq_a, colsq_n, u_acc, v_acc,
                              *, n_true, tb):
    step = pl.program_id(0)
    n_steps = pl.num_programs(0)
    n_pad, d = a_ref.shape
    f32 = jnp.float32
    d_eps2 = f32(d) * f32(EPS) * f32(EPS)
    dims = (((1,), (1,)), ((), ()))  # contract D against D

    @pl.when(step == 0)
    def _init():
        u_acc[...] = jnp.zeros_like(u_acc)
        v_acc[...] = jnp.zeros_like(v_acc)
        # Grid-invariant column squared norms, computed ONCE (hoisted out of
        # the row-block loop).  Squares in f32 for precision; ones-row MXU
        # contraction produces (1, N) directly, avoiding an XLU transpose.
        ones_row = jnp.ones((1, d), f32)
        a_f32 = a_ref[...].astype(f32)
        n_f32 = neg_ref[...].astype(f32)
        colsq_a[...] = lax.dot_general(ones_row, a_f32 * a_f32, dims,
                                       preferred_element_type=f32)
        colsq_n[...] = lax.dot_general(ones_row, n_f32 * n_f32, dims,
                                       preferred_element_type=f32)

    # Row block sliced from the resident full anchor: no second anchor DMA
    # stream, no extra (TB, D) double buffer.
    r0 = pl.multiple_of(step * tb, 8)
    a_blk = a_ref[pl.ds(r0, tb), :]                               # (TB, D)

    rowsq = jnp.sum(a_blk.astype(f32) ** 2, axis=1, keepdims=True)  # (TB, 1)

    # Gram matmuls in the operands' native dtype (bf16 inputs run on the bf16
    # MXU path), f32 accumulation.
    # TODO(synk): if bf16 inputs ever regress tolerance (cancellation in
    # rowsq + colsq - 2*gram), cast only the anchor-anchor gram back to f32.
    gram_aa = lax.dot_general(a_blk, a_ref[...], dims,
                              preferred_element_type=f32)          # (TB, N)
    gram_an = lax.dot_general(a_blk, neg_ref[...], dims,
                              preferred_element_type=f32)          # (TB, N)

    # Squared distances, clamped >= 0 before sqrt.
    # TODO(synk): the 2*eps*(rowsum(x)-rowsum(y)) cross-term of the expanded
    # ||x - y + eps||^2 is dropped (~1e-9 relative, below f32 rounding noise).
    sq_p = jnp.maximum(rowsq + colsq_a[...] - 2.0 * gram_aa, 0.0) + d_eps2
    sq_ng = jnp.maximum(rowsq + colsq_n[...] - 2.0 * gram_an, 0.0) + d_eps2

    # Anchor-anchor diagonal is exactly ||a_i - a_i + eps||^2 = D*eps^2
    # (the gram form cancels catastrophically there, so pin it).
    col_g = lax.broadcasted_iota(jnp.int32, (tb, n_pad), 1)
    row_g = lax.broadcasted_iota(jnp.int32, (tb, 1), 0) + r0
    sq_p = jnp.where(col_g == row_g, d_eps2, sq_p)

    if n_true != n_pad:
        # Zero-padded columns must not contribute to row norms or to u/v.
        col_ok = (col_g < n_true).astype(f32)
        sq_p = sq_p * col_ok
        sq_ng = sq_ng * col_ok

    p_blk = jnp.sqrt(sq_p)      # (TB, N) rows of cdist(anchor, anchor)
    ng_blk = jnp.sqrt(sq_ng)    # (TB, N) rows of cdist(anchor, negative)

    # Row norms reuse the squared distances: ||P_i||^2 = sum_j sq_p[i, j].
    inv_p = lax.rsqrt(jnp.sum(sq_p, axis=1, keepdims=True))     # (TB, 1), EUP
    inv_ng = lax.rsqrt(jnp.sum(sq_ng, axis=1, keepdims=True))   # (TB, 1), EUP

    u_contrib = ng_blk * inv_ng                                  # (TB, N)
    v_contrib = p_blk * inv_p                                    # (TB, N)

    if n_true != n_pad:
        # Zero-padded rows must not contribute to the column sums.
        row_ok = (row_g < n_true).astype(f32)                    # (TB, 1)
        u_contrib = u_contrib * row_ok
        v_contrib = v_contrib * row_ok

    # Deferred sublane reduction: accumulate (8, N) partial column sums with
    # pure VALU adds on full vregs; the cross-sublane reduce happens once, in
    # the finalize step.
    u_acc[...] += jnp.sum(u_contrib.reshape(tb // 8, 8, n_pad), axis=0)
    v_acc[...] += jnp.sum(v_contrib.reshape(tb // 8, 8, n_pad), axis=0)

    @pl.when(step == n_steps - 1)
    def _finalize():
        # mean(C) = <sum_i Ng_i/||Ng_i||, sum_j P_j/||P_j||> / N^2
        u = jnp.sum(u_acc[...], axis=0, keepdims=True)           # (1, N)
        v = jnp.sum(v_acc[...], axis=0, keepdims=True)           # (1, N)
        mean_cos = jnp.sum(u * v, keepdims=True) / f32(n_true * n_true)
        out_ref[...] = jnp.maximum(1.0 - mean_cos, 0.0).astype(out_ref.dtype)


def pairwise_cos_loss(anchor, negative, block_rows=None):
    assert anchor.ndim == 2, f"got {anchor.ndim}"
    assert negative.ndim == 2, f"got {negative.ndim}"
    assert anchor.shape[1] == negative.shape[1]
    # pairwise_cosine_similarity(Ng (N,M), P (N,N)) requires M == N.
    assert negative.shape[0] == anchor.shape[0]
    n, d = anchor.shape

    # Row blocking: prefer a single large MXU-aligned block for small N,
    # cap at 128 rows for large N (keeps (TB, N) f32 temporaries modest,
    # important for v7x's 64 MiB VMEM). Awkward N is padded up with zeros.
    if block_rows is None:
        tb = _round_up(n, 8) if n <= 256 else 128
    else:
        assert block_rows % 8 == 0, "block_rows must be a multiple of 8"
        tb = block_rows
    n_pad = _round_up(n, tb)

    if n_pad != n:
        pad = n_pad - n
        anchor_p = jnp.pad(anchor, ((0, pad), (0, 0)))
        negative_p = jnp.pad(negative, ((0, pad), (0, 0)))
    else:
        anchor_p, negative_p = anchor, negative

    grid = (n_pad // tb,)

    # Explicit VMEM budget (defaults are only 16/32 MiB scoped): resident
    # (N,D) inputs (double-buffered by the pipeline even though constant),
    # live (TB,N) f32 slabs, plus the small scratch vectors. 1.5x headroom.
    itemsize = jnp.dtype(anchor.dtype).itemsize
    resident = 2 * n_pad * d * itemsize * 2
    temps = 8 * tb * n_pad * 4
    scratch = (2 * 1 + 2 * 8) * n_pad * 4
    vmem_limit = int(1.5 * (resident + temps + scratch)) + (2 << 20)
    vmem_limit = max(32 << 20, min(vmem_limit, 100 << 20))

    kernel = functools.partial(_pairwise_cos_loss_kernel, n_true=n, tb=tb)

    out = pl.pallas_call(
        kernel,
        out_shape=jax.ShapeDtypeStruct((1, 1), jnp.float32),
        grid_spec=pltpu.PrefetchScalarGridSpec(
            num_scalar_prefetch=0,
            grid=grid,
            in_specs=[
                pl.BlockSpec((n_pad, d), lambda i: (0, 0)),   # full anchor, resident
                pl.BlockSpec((n_pad, d), lambda i: (0, 0)),   # full negative, resident
            ],
            out_specs=pl.BlockSpec((1, 1), lambda i: (0, 0)),
            scratch_shapes=[
                pltpu.VMEM((1, n_pad), jnp.float32),   # colsq anchor (hoisted)
                pltpu.VMEM((1, n_pad), jnp.float32),   # colsq negative (hoisted)
                pltpu.VMEM((8, n_pad), jnp.float32),   # u: partial column sums (Ng rows, normalized)
                pltpu.VMEM((8, n_pad), jnp.float32),   # v: partial column sums (P rows, normalized)
            ],
        ),
        compiler_params=pltpu.CompilerParams(
            dimension_semantics=("arbitrary",),        # cross-step accumulation axis
            vmem_limit_bytes=vmem_limit),
    )(anchor_p, negative_p)
    return out[0, 0]


def _reference(anchor, negative):
    """Pure-JAX reference matching the PyTorch forward."""
    def cdist(x, y):
        diff = x[:, None, :] - y[None, :, :] + EPS
        return jnp.sqrt(jnp.sum(diff ** 2, axis=-1))
    pos = cdist(anchor, anchor)
    neg = cdist(anchor, negative)
    neg_n = neg / jnp.linalg.norm(neg, axis=1, keepdims=True)
    pos_n = pos / jnp.linalg.norm(pos, axis=1, keepdims=True)
    cos = neg_n @ pos_n.T
    return jnp.maximum(1.0 - jnp.mean(cos), 0.0)


if __name__ == "__main__":
    key = jax.random.PRNGKey(0)
    k1, k2, k3, k4, k5, k6 = jax.random.split(key, 6)

    # Case 1: tiny, single grid step, MXU-aligned.
    a1 = jax.random.normal(k1, (8, 128), dtype=jnp.float32)
    g1 = jax.random.normal(k2, (8, 128), dtype=jnp.float32)
    loss1 = pairwise_cos_loss(a1, g1)
    jax.block_until_ready(loss1)
    ref1 = _reference(a1, g1)
    assert jnp.allclose(loss1, ref1, atol=1e-4, rtol=1e-4), (loss1, ref1)

    # Case 2: multi-step grid (exercises hoisted colsq scratch reuse, the
    # (8, N) deferred-reduce accumulators and the pl.when finalize).
    a2 = jax.random.normal(k3, (48, 128), dtype=jnp.float32)
    g2 = jax.random.normal(k4, (48, 128), dtype=jnp.float32)
    loss2 = pairwise_cos_loss(a2, g2, block_rows=16)
    jax.block_until_ready(loss2)
    ref2 = _reference(a2, g2)
    assert jnp.allclose(loss2, ref2, atol=1e-4, rtol=1e-4), (loss2, ref2)

    # Case 3: N not a multiple of 8 (exercises zero-row padding + row/column
    # masking), multi-step.
    a3 = jax.random.normal(k5, (20, 64), dtype=jnp.float32)
    g3 = jax.random.normal(k6, (20, 64), dtype=jnp.float32)
    loss3 = pairwise_cos_loss(a3, g3, block_rows=8)
    jax.block_until_ready(loss3)
    ref3 = _reference(a3, g3)
    assert jnp.allclose(loss3, ref3, atol=1e-4, rtol=1e-4), (loss3, ref3)

    print("KERNEL_OK")
</pallas_src>

<mosaic_0001>
module attributes {stable_mosaic.version = 11 : i64} {
  func.func @_pairwise_cos_loss_kernel(%arg0: i32, %arg1: memref<8x128xf32, #tpu.memory_space<vmem>>, %arg2: memref<8x128xf32, #tpu.memory_space<vmem>>, %arg3: memref<1x1xf32, #tpu.memory_space<vmem>>, %arg4: memref<1x8xf32, #tpu.memory_space<vmem>>, %arg5: memref<1x8xf32, #tpu.memory_space<vmem>>, %arg6: memref<8x8xf32, #tpu.memory_space<vmem>>, %arg7: memref<8x8xf32, #tpu.memory_space<vmem>>) attributes {dimension_semantics = [#tpu.dimension_semantics<arbitrary>], iteration_bounds = array<i64: 1>, scalar_prefetch = 0 : i64, scratch_operands = 4 : i64, tpu.core_type = #tpu.core_type<tc>, window_params = [{pipeline_mode = #tpu.pipeline_mode<synchronous>, transform_indices = @transform_0, window_bounds = array<i64: 8, 128>}, {pipeline_mode = #tpu.pipeline_mode<synchronous>, transform_indices = @transform_1, window_bounds = array<i64: 8, 128>}, {pipeline_mode = #tpu.pipeline_mode<synchronous>, transform_indices = @transform_2, window_bounds = array<i64: 1, 1>}]} {
    %cst = arith.constant 1.280000e+02 : f32
    %cst_0 = arith.constant 9.99999993E-9 : f32
    %0 = arith.mulf %cst, %cst_0 : f32
    %cst_1 = arith.constant 9.99999993E-9 : f32
    %1 = arith.mulf %0, %cst_1 : f32
    %c0_i32 = arith.constant 0 : i32
    %2 = arith.cmpi eq, %arg0, %c0_i32 : i32
    %3 = arith.extui %2 : i1 to i32
    %c0_i32_2 = arith.constant 0 : i32
    %4 = arith.cmpi ne, %3, %c0_i32_2 : i32
    scf.if %4 {
      %cst_32 = arith.constant 0.000000e+00 : f32
      %71 = vector.broadcast %cst_32 : f32 to vector<8x8xf32>
      %c0_33 = arith.constant 0 : index
      %c0_34 = arith.constant 0 : index
      %72 = vector.load %arg6[%c0_33, %c0_34] : memref<8x8xf32, #tpu.memory_space<vmem>>, vector<8x8xf32>
      tpu.vector_store %arg6[%c0_33, %c0_34], %71 {strides = array<i32>} : memref<8x8xf32, #tpu.memory_space<vmem>>, vector<8x8xf32>,
      %cst_35 = arith.constant 0.000000e+00 : f32
      %73 = vector.broadcast %cst_35 : f32 to vector<8x8xf32>
      %c0_36 = arith.constant 0 : index
      %c0_37 = arith.constant 0 : index
      %74 = vector.load %arg7[%c0_36, %c0_37] : memref<8x8xf32, #tpu.memory_space<vmem>>, vector<8x8xf32>
      tpu.vector_store %arg7[%c0_36, %c0_37], %73 {strides = array<i32>} : memref<8x8xf32, #tpu.memory_space<vmem>>, vector<8x8xf32>,
      %cst_38 = arith.constant 1.000000e+00 : f32
      %75 = vector.broadcast %cst_38 : f32 to vector<1x128xf32>
      %c0_39 = arith.constant 0 : index
      %c0_40 = arith.constant 0 : index
      %76 = vector.load %arg1[%c0_39, %c0_40] : memref<8x128xf32, #tpu.memory_space<vmem>>, vector<8x128xf32>
      %c0_41 = arith.constant 0 : index
      %c0_42 = arith.constant 0 : index
      %77 = vector.load %arg2[%c0_41, %c0_42] : memref<8x128xf32, #tpu.memory_space<vmem>>, vector<8x128xf32>
      %78 = arith.mulf %76, %76 : vector<8x128xf32>
      %cst_43 = arith.constant dense<0.000000e+00> : vector<1x8xf32>
      %79 = tpu.matmul %75, %78, %cst_43 {dimension_numbers = #tpu.dot_dimension_numbers<[1], [1], [0], [0], [0, 0, 1, 0], [], []>} : vector<1x128xf32>, vector<8x128xf32>, vector<1x8xf32> -> vector<1x8xf32>
      %c0_44 = arith.constant 0 : index
      %c0_45 = arith.constant 0 : index
      %80 = vector.load %arg4[%c0_44, %c0_45] : memref<1x8xf32, #tpu.memory_space<vmem>>, vector<1x8xf32>
      tpu.vector_store %arg4[%c0_44, %c0_45], %79 {strides = array<i32>} : memref<1x8xf32, #tpu.memory_space<vmem>>, vector<1x8xf32>,
      %81 = arith.mulf %77, %77 : vector<8x128xf32>
      %cst_46 = arith.constant dense<0.000000e+00> : vector<1x8xf32>
      %82 = tpu.matmul %75, %81, %cst_46 {dimension_numbers = #tpu.dot_dimension_numbers<[1], [1], [0], [0], [0, 0, 1, 0], [], []>} : vector<1x128xf32>, vector<8x128xf32>, vector<1x8xf32> -> vector<1x8xf32>
      %c0_47 = arith.constant 0 : index
      %c0_48 = arith.constant 0 : index
      %83 = vector.load %arg5[%c0_47, %c0_48] : memref<1x8xf32, #tpu.memory_space<vmem>>, vector<1x8xf32>
      tpu.vector_store %arg5[%c0_47, %c0_48], %82 {strides = array<i32>} : memref<1x8xf32, #tpu.memory_space<vmem>>, vector<1x8xf32>,
    } else {
    }
    %c8_i32 = arith.constant 8 : i32
    %5 = arith.muli %arg0, %c8_i32 : i32
    %6 = tpu.assume_multiple %5, 8 : i32
    %7 = arith.index_cast %6 : i32 to index
    %c0 = arith.constant 0 : index
    %8 = vector.load %arg1[%7, %c0] : memref<8x128xf32, #tpu.memory_space<vmem>>, vector<8x128xf32>
    %9 = arith.mulf %8, %8 : vector<8x128xf32>
    %cst_3 = arith.constant dense<0.000000e+00> : vector<8xf32>
    %10 = vector.multi_reduction <add>, %9, %cst_3 [1] : vector<8x128xf32> to vector<8xf32>
    %11 = vector.shape_cast %10 : vector<8xf32> to vector<8x1xf32>
    %c0_4 = arith.constant 0 : index
    %c0_5 = arith.constant 0 : index
    %12 = vector.load %arg1[%c0_4, %c0_5] : memref<8x128xf32, #tpu.memory_space<vmem>>, vector<8x128xf32>
    %cst_6 = arith.constant dense<0.000000e+00> : vector<8x8xf32>
    %13 = tpu.matmul %8, %12, %cst_6 {dimension_numbers = #tpu.dot_dimension_numbers<[1], [1], [0], [0], [0, 0, 1, 0], [], []>} : vector<8x128xf32>, vector<8x128xf32>, vector<8x8xf32> -> vector<8x8xf32>
    %c0_7 = arith.constant 0 : index
    %c0_8 = arith.constant 0 : index
    %14 = vector.load %arg2[%c0_7, %c0_8] : memref<8x128xf32, #tpu.memory_space<vmem>>, vector<8x128xf32>
    %cst_9 = arith.constant dense<0.000000e+00> : vector<8x8xf32>
    %15 = tpu.matmul %8, %14, %cst_9 {dimension_numbers = #tpu.dot_dimension_numbers<[1], [1], [0], [0], [0, 0, 1, 0], [], []>} : vector<8x128xf32>, vector<8x128xf32>, vector<8x8xf32> -> vector<8x8xf32>
    %c0_10 = arith.constant 0 : index
    %c0_11 = arith.constant 0 : index
    %16 = vector.load %arg4[%c0_10, %c0_11] : memref<1x8xf32, #tpu.memory_space<vmem>>, vector<1x8xf32>
    %17 = vector.broadcast %11 : vector<8x1xf32> to vector<8x8xf32>
    %18 = vector.broadcast %16 : vector<1x8xf32> to vector<8x8xf32>
    %19 = arith.addf %17, %18 : vector<8x8xf32>
    %cst_12 = arith.constant 2.000000e+00 : f32
    %20 = vector.broadcast %cst_12 : f32 to vector<8x8xf32>
    %21 = arith.mulf %20, %13 : vector<8x8xf32>
    %22 = arith.subf %19, %21 : vector<8x8xf32>
    %cst_13 = arith.constant 0.000000e+00 : f32
    %23 = vector.broadcast %cst_13 : f32 to vector<8x8xf32>
    %24 = arith.maximumf %22, %23 : vector<8x8xf32>
    %25 = vector.broadcast %1 : f32 to vector<8x8xf32>
    %26 = arith.addf %24, %25 : vector<8x8xf32>
    %c0_14 = arith.constant 0 : index
    %c0_15 = arith.constant 0 : index
    %27 = vector.load %arg5[%c0_14, %c0_15] : memref<1x8xf32, #tpu.memory_space<vmem>>, vector<1x8xf32>
    %28 = vector.broadcast %11 : vector<8x1xf32> to vector<8x8xf32>
    %29 = vector.broadcast %27 : vector<1x8xf32> to vector<8x8xf32>
    %30 = arith.addf %28, %29 : vector<8x8xf32>
    %cst_16 = arith.constant 2.000000e+00 : f32
    %31 = vector.broadcast %cst_16 : f32 to vector<8x8xf32>
    %32 = arith.mulf %31, %15 : vector<8x8xf32>
    %33 = arith.subf %30, %32 : vector<8x8xf32>
    %cst_17 = arith.constant 0.000000e+00 : f32
    %34 = vector.broadcast %cst_17 : f32 to vector<8x8xf32>
    %35 = arith.maximumf %33, %34 : vector<8x8xf32>
    %36 = vector.broadcast %1 : f32 to vector<8x8xf32>
    %37 = arith.addf %35, %36 : vector<8x8xf32>
    %38 = tpu.iota {dimensions = array<i32: 1>} : vector<8x8xi32>
    %39 = tpu.iota {dimensions = array<i32: 0>} : vector<8x1xi32>
    %40 = vector.broadcast %6 : i32 to vector<8x1xi32>
    %41 = arith.addi %39, %40 : vector<8x1xi32>
    %42 = vector.broadcast %41 : vector<8x1xi32> to vector<8x8xi32>
    %43 = arith.cmpi eq, %38, %42 : vector<8x8xi32>
    %44 = vector.broadcast %1 : f32 to vector<8x8xf32>
    %45 = arith.select %43, %44, %26 : vector<8x8xi1>, vector<8x8xf32>
    %46 = math.sqrt %45 : vector<8x8xf32>
    %47 = math.sqrt %37 : vector<8x8xf32>
    %cst_18 = arith.constant dense<0.000000e+00> : vector<8xf32>
    %48 = vector.multi_reduction <add>, %45, %cst_18 [1] : vector<8x8xf32> to vector<8xf32>
    %49 = vector.shape_cast %48 : vector<8xf32> to vector<8x1xf32>
    %50 = math.rsqrt %49 : vector<8x1xf32>
    %cst_19 = arith.constant dense<0.000000e+00> : vector<8xf32>
    %51 = vector.multi_reduction <add>, %37, %cst_19 [1] : vector<8x8xf32> to vector<8xf32>
    %52 = vector.shape_cast %51 : vector<8xf32> to vector<8x1xf32>
    %53 = math.rsqrt %52 : vector<8x1xf32>
    %54 = vector.broadcast %53 : vector<8x1xf32> to vector<8x8xf32>
    %55 = arith.mulf %47, %54 : vector<8x8xf32>
    %56 = vector.broadcast %50 : vector<8x1xf32> to vector<8x8xf32>
    %57 = arith.mulf %46, %56 : vector<8x8xf32>
    %c0_20 = arith.constant 0 : index
    %c0_21 = arith.constant 0 : index
    %58 = vector.load %arg6[%c0_20, %c0_21] : memref<8x8xf32, #tpu.memory_space<vmem>>, vector<8x8xf32>
    %59 = vector.shape_cast %55 : vector<8x8xf32> to vector<1x8x8xf32>
    %cst_22 = arith.constant dense<0.000000e+00> : vector<8x8xf32>
    %60 = vector.multi_reduction <add>, %59, %cst_22 [0] : vector<1x8x8xf32> to vector<8x8xf32>
    %61 = arith.addf %58, %60 : vector<8x8xf32>
    %c0_23 = arith.constant 0 : index
    %c0_24 = arith.constant 0 : index
    %62 = vector.load %arg6[%c0_23, %c0_24] : memref<8x8xf32, #tpu.memory_space<vmem>>, vector<8x8xf32>
    tpu.vector_store %arg6[%c0_23, %c0_24], %61 {strides = array<i32>} : memref<8x8xf32, #tpu.memory_space<vmem>>, vector<8x8xf32>,
    %c0_25 = arith.constant 0 : index
    %c0_26 = arith.constant 0 : index
    %63 = vector.load %arg7[%c0_25, %c0_26] : memref<8x8xf32, #tpu.memory_space<vmem>>, vector<8x8xf32>
    %64 = vector.shape_cast %57 : vector<8x8xf32> to vector<1x8x8xf32>
    %cst_27 = arith.constant dense<0.000000e+00> : vector<8x8xf32>
    %65 = vector.multi_reduction <add>, %64, %cst_27 [0] : vector<1x8x8xf32> to vector<8x8xf32>
    %66 = arith.addf %63, %65 : vector<8x8xf32>
    %c0_28 = arith.constant 0 : index
    %c0_29 = arith.constant 0 : index
    %67 = vector.load %arg7[%c0_28, %c0_29] : memref<8x8xf32, #tpu.memory_space<vmem>>, vector<8x8xf32>
    tpu.vector_store %arg7[%c0_28, %c0_29], %66 {strides = array<i32>} : memref<8x8xf32, #tpu.memory_space<vmem>>, vector<8x8xf32>,
    %c0_i32_30 = arith.constant 0 : i32
    %68 = arith.cmpi eq, %arg0, %c0_i32_30 : i32
    %69 = arith.extui %68 : i1 to i32
    %c0_i32_31 = arith.constant 0 : i32
    %70 = arith.cmpi ne, %69, %c0_i32_31 : i32
    scf.if %70 {
      %c0_32 = arith.constant 0 : index
      %c0_33 = arith.constant 0 : index
      %71 = vector.load %arg6[%c0_32, %c0_33] : memref<8x8xf32, #tpu.memory_space<vmem>>, vector<8x8xf32>
      %cst_34 = arith.constant dense<0.000000e+00> : vector<8xf32>
      %72 = vector.multi_reduction <add>, %71, %cst_34 [0] : vector<8x8xf32> to vector<8xf32>
      %73 = vector.shape_cast %72 : vector<8xf32> to vector<1x8xf32>
      %c0_35 = arith.constant 0 : index
      %c0_36 = arith.constant 0 : index
      %74 = vector.load %arg7[%c0_35, %c0_36] : memref<8x8xf32, #tpu.memory_space<vmem>>, vector<8x8xf32>
      %cst_37 = arith.constant dense<0.000000e+00> : vector<8xf32>
      %75 = vector.multi_reduction <add>, %74, %cst_37 [0] : vector<8x8xf32> to vector<8xf32>
      %76 = vector.shape_cast %75 : vector<8xf32> to vector<1x8xf32>
      %77 = arith.mulf %73, %76 : vector<1x8xf32>
      %78 = vector.shape_cast %77 : vector<1x8xf32> to vector<1x1x8xf32>
      %cst_38 = arith.constant dense<0.000000e+00> : vector<1xf32>
      %79 = vector.multi_reduction <add>, %78, %cst_38 [1, 2] : vector<1x1x8xf32> to vector<1xf32>
      %80 = vector.shape_cast %79 : vector<1xf32> to vector<1x1x1xf32>
      %81 = vector.extract %80[0, 0, 0] : f32 from vector<1x1x1xf32>
      %82 = vector.broadcast %81 : f32 to vector<1x1xf32>
      %cst_39 = arith.constant 6.400000e+01 : f32
      %83 = vector.broadcast %cst_39 : f32 to vector<1x1xf32>
      %84 = arith.divf %82, %83 : vector<1x1xf32>
      %cst_40 = arith.constant 1.000000e+00 : f32
      %85 = vector.broadcast %cst_40 : f32 to vector<1x1xf32>
      %86 = arith.subf %85, %84 : vector<1x1xf32>
      %cst_41 = arith.constant 0.000000e+00 : f32
      %87 = vector.broadcast %cst_41 : f32 to vector<1x1xf32>
      %88 = arith.maximumf %86, %87 : vector<1x1xf32>
      %c0_42 = arith.constant 0 : index
      %c0_43 = arith.constant 0 : index
      %89 = vector.load %arg3[%c0_42, %c0_43] : memref<1x1xf32, #tpu.memory_space<vmem>>, vector<1x1xf32>
      tpu.vector_store %arg3[%c0_42, %c0_43], %88 {strides = array<i32>} : memref<1x1xf32, #tpu.memory_space<vmem>>, vector<1x1xf32>,
    } else {
    }
    return
  }
  func.func @transform_0(%arg0: i32) -> (i32, i32) {
    %c0_i32 = arith.constant 0 : i32
    %c0_i32_0 = arith.constant 0 : i32
    %c0_i32_1 = arith.constant 0 : i32
    return %c0_i32, %c0_i32_0 : i32, i32
  }
  func.func @transform_1(%arg0: i32) -> (i32, i32) {
    %c0_i32 = arith.constant 0 : i32
    %c0_i32_0 = arith.constant 0 : i32
    %c0_i32_1 = arith.constant 0 : i32
    return %c0_i32, %c0_i32_0 : i32, i32
  }
  func.func @transform_2(%arg0: i32) -> (i32, i32) {
    %c0_i32 = arith.constant 0 : i32
    %c0_i32_0 = arith.constant 0 : i32
    %c0_i32_1 = arith.constant 0 : i32
    return %c0_i32, %c0_i32_0 : i32, i32
  }
}

</mosaic_0001>

<llo_original>
// kernel: tpu_custom_call.1
$region0: #{tpu_custom_call.1}
  #allocation0 [shape = 'u32[]', space=smem, size = 0x4, offset = 0x4, fixed_abs, tag = 'smem constant byte address 0x4 - core index']
  #allocation1 [shape = 'u32[144,128]{1,0:T(1,128)}', space=vmem, size = 0x12000, scoped, tag = 'internal scratch']
  #allocation2 [shape = 'f32[1,8]{1,0:T(1,128)}', space=vmem, size = 0x200, scoped, tag = 'scratch operand']
  #allocation3 [shape = 'f32[1,8]{1,0:T(1,128)}', space=vmem, size = 0x200, scoped, tag = 'scratch operand']
  #allocation4 [shape = 'f32[8,8]{1,0:T(8,128)}', space=vmem, size = 0x1000, scoped, tag = 'scratch operand']
  #allocation5 [shape = 'f32[8,8]{1,0:T(8,128)}', space=vmem, size = 0x1000, scoped, tag = 'scratch operand']
  %s0 = inlined_call_operand.hbm [shape: f32[8,128], index: 0, kind: input, shape index: {}]
  %s1 = inlined_call_operand.hbm [shape: f32[8,128], index: 1, kind: input, shape index: {}]
  %s2 = inlined_call_operand.hbm [shape: f32[1,1], index: 2, kind: output, shape index: {}]
  %s3 = sld [smem:[#allocation0]]
  $region34: #{tpu_custom_call.1} parent=0
    _
  %s5 = ssub.s32 1, %s3
  %s6 = scalar_select 0, %s5, %s3
  $region1: #{tpu_custom_call.1} parent=0
    #allocation6 [shape = 'u8[4096]{0}', space=vmem, size = 0x1000, scoped, tag = 'input window, operand 0, single buffered']
    #allocation7 [shape = 's32[1]{0}', space=sflag, size = 0x4, scoped, tag = 'scoped memory for tpu_custom_call.1']
    #allocation8 [shape = 's32[1]{0}', space=sflag, size = 0x4, scoped, tag = 'scoped memory for tpu_custom_call.1']
    #allocation9 [shape = 'u8[4096]{0}', space=vmem, size = 0x1000, scoped, tag = 'input window, operand 1, single buffered']
    #allocation10 [shape = 's32[1]{0}', space=sflag, size = 0x4, scoped, tag = 'scoped memory for tpu_custom_call.1']
    #allocation11 [shape = 'u8[512]{0}', space=vmem, size = 0x400, scoped, tag = 'output window, operand 0, single buffered']
    %7 = vsyncpa [#allocation7], 0
    %8 = vsyncpa [#allocation10], 0
    %9 = vsyncpa [#allocation8], 0
    // Predicated region
    $region2: #{tpu_custom_call.1} parent=1 // pred_check
      _
    $region3: #{tpu_custom_call.1} parent=1 // pred_check_branch
      %11 = sbr.rel (0) target = $region5
    $region4: #{tpu_custom_call.1} parent=1 // pred_region
      %s13 = ssub.s32 128, 128
      %14 = vsyncadd [#allocation7], %s13
      %s16 = sshll.u32 [#allocation6], 4
      %s17 = int_to_ptr.vmem [resolvable:$true] %s16
      %19 = dma.hbm_to_vmem [thread:$0]  %s0, 128, %s17, [#allocation7]
    $region5: #{tpu_custom_call.1} parent=1 // pred_fallthru
      _
    // Predicated region
    $region6: #{tpu_custom_call.1} parent=1 // pred_check
      _
    $region7: #{tpu_custom_call.1} parent=1 // pred_check_branch
      %21 = sbr.rel (0) target = $region9
    $region8: #{tpu_custom_call.1} parent=1 // pred_region
      %s23 = ssub.s32 128, 128
      %24 = vsyncadd [#allocation10], %s23
      %s26 = sshll.u32 [#allocation9], 4
      %s27 = int_to_ptr.vmem [resolvable:$true] %s26
      %29 = dma.hbm_to_vmem [thread:$0]  %s1, 128, %s27, [#allocation10]
    $region9: #{tpu_custom_call.1} parent=1 // pred_fallthru
      _
    // Predicated region
    $region10: #{tpu_custom_call.1} parent=1 // pred_check
      _
    $region11: #{tpu_custom_call.1} parent=1 // pred_check_branch
      %31 = sbr.rel (0) target = $region13
    $region12: #{tpu_custom_call.1} parent=1 // pred_region
      %32 = dma.done [#allocation7], 128
    $region13: #{tpu_custom_call.1} parent=1 // pred_fallthru
      _
    // Predicated region
    $region14: #{tpu_custom_call.1} parent=1 // pred_check
      _
    $region15: #{tpu_custom_call.1} parent=1 // pred_check_branch
      %34 = sbr.rel (0) target = $region17
    $region16: #{tpu_custom_call.1} parent=1 // pred_region
      %35 = dma.done [#allocation10], 128
    $region17: #{tpu_custom_call.1} parent=1 // pred_fallthru
      _
    %p36 = scmp.eq.s32.totalorder 0, 0
    // Predicated region
    $region18: #{tpu_custom_call.1} parent=1 // pred_check
      %p37 = pneg %p36
    $region19: #{tpu_custom_call.1} parent=1 // pred_check_branch
      %39 = sbr.rel (%p37) target = $region21
    $region20: #{tpu_custom_call.1} parent=1 // pred_region
      %vm40 = vcmask 64512
      %41 = vst.msk [vmem:[#allocation4] sm:$0xff] %vm40, 0.0
      %42 = vst.msk [vmem:[#allocation5] sm:$0xff] %vm40, 0.0
      %v43 = vld [vmem:[#allocation6] sm:$0xff]
      %v44 = vld [vmem:[#allocation9] sm:$0xff]
      %v45 = vmul.f32 %v43, %v43
      %46 = vmatprep.subr.mxu0 0.0
      %47 = vmatpush1.xpose.msra.mxu0 0.0
      %48 = vmatprep.subr.mxu0 0.0
      %49 = vmatpush1.xpose.msra.mxu0 0.0
      %50 = vmatprep.subr.mxu0 0.0
      %51 = vmatpush1.xpose.msra.mxu0 0.0
      %52 = vmatprep.subr.mxu0 0.0
      %53 = vmatpush1.xpose.msra.mxu0 0.0
      %54 = vmatprep.subr.mxu0 0.0
      %55 = vmatpush1.xpose.msra.mxu0 0.0
      %56 = vmatprep.subr.mxu0 0.0
      %57 = vmatpush1.xpose.msra.mxu0 0.0
      %58 = vmatprep.subr.mxu0 0.0
      %59 = vmatpush1.xpose.msra.mxu0 0.0
      %60 = vmatprep.subr.mxu0 0.0
      %61 = vmatpush1.xpose.msra.mxu0 0.0
      %62 = vmatprep.subr.mxu0 0.0
      %63 = vmatpush1.xpose.msra.mxu0 0.0
      %64 = vmatprep.subr.mxu0 0.0
      %65 = vmatpush1.xpose.msra.mxu0 0.0
      %66 = vmatprep.subr.mxu0 0.0
      %67 = vmatpush1.xpose.msra.mxu0 0.0
      %68 = vmatprep.subr.mxu0 0.0
      %69 = vmatpush1.xpose.msra.mxu0 0.0
      %70 = vmatprep.subr.mxu0 0.0
      %71 = vmatpush1.xpose.msra.mxu0 0.0
      %72 = vmatprep.subr.mxu0 0.0
      %73 = vmatpush1.xpose.msra.mxu0 0.0
      %74 = vmatprep.subr.mxu0 0.0
      %75 = vmatpush1.xpose.msra.mxu0 0.0
      %76 = vmatprep.subr.mxu0 0.0
      %77 = vmatpush1.xpose.msra.mxu0 %v45
      %78 = vmatprep.subr.mxu0 0.0
      %79 = vmatpush2.xpose.msra.mxu0 0.0
      %80 = vmatprep.subr.mxu0 0.0
      %81 = vmatpush2.xpose.msra.mxu0 0.0
      %82 = vmatprep.subr.mxu0 0.0
      %83 = vmatpush2.xpose.msra.mxu0 0.0
      %84 = vmatprep.subr.mxu0 0.0
      %85 = vmatpush2.xpose.msra.mxu0 0.0
      %86 = vmatprep.subr.mxu0 0.0
      %87 = vmatpush2.xpose.msra.mxu0 0.0
      %88 = vmatprep.subr.mxu0 0.0
      %89 = vmatpush2.xpose.msra.mxu0 0.0
      %90 = vmatprep.subr.mxu0 0.0
      %91 = vmatpush2.xpose.msra.mxu0 0.0
      %92 = vmatprep.subr.mxu0 0.0
      %93 = vmatpush2.xpose.msra.mxu0 0.0
      %94 = vmatprep.subr.mxu0 0.0
      %95 = vmatpush2.xpose.msra.mxu0 0.0
      %96 = vmatprep.subr.mxu0 0.0
      %97 = vmatpush2.xpose.msra.mxu0 0.0
      %98 = vmatprep.subr.mxu0 0.0
      %99 = vmatpush2.xpose.msra.mxu0 0.0
      %100 = vmatprep.subr.mxu0 0.0
      %101 = vmatpush2.xpose.msra.mxu0 0.0
      %102 = vmatprep.subr.mxu0 0.0
      %103 = vmatpush2.xpose.msra.mxu0 0.0
      %104 = vmatprep.subr.mxu0 0.0
      %105 = vmatpush2.xpose.msra.mxu0 0.0
      %106 = vmatprep.subr.mxu0 0.0
      %107 = vmatpush2.xpose.msra.mxu0 0.0
      %108 = vmatprep.subr.mxu0 0.0
      %109 = vmatpush2.xpose.msra.mxu0 0.0
      %110 = vmatprep.mubr.f32.mxu0 0.0
      %111 = vmatmul.mubr.f32.gmra.mxu0 1.0
      %v112 = vpop.f32.mrf.mxu0
      %v113 = vadd.f32 0.0, %v112
      %v114 = vpop.f32.mrf.mxu0
      %115 = vdwg.mxu0
      %vm116 = vcmask 57344
      %117 = vst.msk [vmem:[#allocation2] sm:$0x1] %vm116, %v113
      %v118 = vmul.f32 %v44, %v44
      %119 = vmatprep.subr.mxu0 0.0
      %120 = vmatpush1.xpose.msra.mxu0 0.0
      %121 = vmatprep.subr.mxu0 0.0
      %122 = vmatpush1.xpose.msra.mxu0 0.0
      %123 = vmatprep.subr.mxu0 0.0
      %124 = vmatpush1.xpose.msra.mxu0 0.0
      %125 = vmatprep.subr.mxu0 0.0
      %126 = vmatpush1.xpose.msra.mxu0 0.0
      %127 = vmatprep.subr.mxu0 0.0
      %128 = vmatpush1.xpose.msra.mxu0 0.0
      %129 = vmatprep.subr.mxu0 0.0
      %130 = vmatpush1.xpose.msra.mxu0 0.0
      %131 = vmatprep.subr.mxu0 0.0
      %132 = vmatpush1.xpose.msra.mxu0 0.0
      %133 = vmatprep.subr.mxu0 0.0
      %134 = vmatpush1.xpose.msra.mxu0 0.0
      %135 = vmatprep.subr.mxu0 0.0
      %136 = vmatpush1.xpose.msra.mxu0 0.0
      %137 = vmatprep.subr.mxu0 0.0
      %138 = vmatpush1.xpose.msra.mxu0 0.0
      %139 = vmatprep.subr.mxu0 0.0
      %140 = vmatpush1.xpose.msra.mxu0 0.0
      %141 = vmatprep.subr.mxu0 0.0
      %142 = vmatpush1.xpose.msra.mxu0 0.0
      %143 = vmatprep.subr.mxu0 0.0
      %144 = vmatpush1.xpose.msra.mxu0 0.0
      %145 = vmatprep.subr.mxu0 0.0
      %146 = vmatpush1.xpose.msra.mxu0 0.0
      %147 = vmatprep.subr.mxu0 0.0
      %148 = vmatpush1.xpose.msra.mxu0 0.0
      %149 = vmatprep.subr.mxu0 0.0
      %150 = vmatpush1.xpose.msra.mxu0 %v118
      %151 = vmatprep.subr.mxu0 0.0
      %152 = vmatpush2.xpose.msra.mxu0 0.0
      %153 = vmatprep.subr.mxu0 0.0
      %154 = vmatpush2.xpose.msra.mxu0 0.0
      %155 = vmatprep.subr.mxu0 0.0
      %156 = vmatpush2.xpose.msra.mxu0 0.0
      %157 = vmatprep.subr.mxu0 0.0
      %158 = vmatpush2.xpose.msra.mxu0 0.0
      %159 = vmatprep.subr.mxu0 0.0
      %160 = vmatpush2.xpose.msra.mxu0 0.0
      %161 = vmatprep.subr.mxu0 0.0
      %162 = vmatpush2.xpose.msra.mxu0 0.0
      %163 = vmatprep.subr.mxu0 0.0
      %164 = vmatpush2.xpose.msra.mxu0 0.0
      %165 = vmatprep.subr.mxu0 0.0
      %166 = vmatpush2.xpose.msra.mxu0 0.0
      %167 = vmatprep.subr.mxu0 0.0
      %168 = vmatpush2.xpose.msra.mxu0 0.0
      %169 = vmatprep.subr.mxu0 0.0
      %170 = vmatpush2.xpose.msra.mxu0 0.0
      %171 = vmatprep.subr.mxu0 0.0
      %172 = vmatpush2.xpose.msra.mxu0 0.0
      %173 = vmatprep.subr.mxu0 0.0
      %174 = vmatpush2.xpose.msra.mxu0 0.0
      %175 = vmatprep.subr.mxu0 0.0
      %176 = vmatpush2.xpose.msra.mxu0 0.0
      %177 = vmatprep.subr.mxu0 0.0
      %178 = vmatpush2.xpose.msra.mxu0 0.0
      %179 = vmatprep.subr.mxu0 0.0
      %180 = vmatpush2.xpose.msra.mxu0 0.0
      %181 = vmatprep.subr.mxu0 0.0
      %182 = vmatpush2.xpose.msra.mxu0 0.0
      %183 = vmatprep.mubr.f32.mxu0 0.0
      %184 = vmatmul.mubr.f32.gmra.mxu0 1.0
      %v185 = vpop.f32.mrf.mxu0
      %v186 = vadd.f32 0.0, %v185
      %v187 = vpop.f32.mrf.mxu0
      %188 = vdwg.mxu0
      %189 = vst.msk [vmem:[#allocation3] sm:$0x1] %vm116, %v186
    $region21: #{tpu_custom_call.1} parent=1 // pred_fallthru
      _
    %s190 = smul.u32 0, 8
    %s191 = scalar_lea.vmem [#allocation6], %s190
    %v192 = vld [vmem:[%s191] sm:$0xff]
    %v193 = vmul.f32 %v192, %v192
    %194 = vadd.xlane.f32.xlu0 %v193
    %v195 = vpop.xlane.xlu0 %194
    %v196 = vld [vmem:[#allocation6] sm:$0xff]
    %197 = vmatprep.subr.mxu0 0.0
    %198 = vmatpush1.xpose.msra.mxu0 0.0
    %199 = vmatprep.subr.mxu0 0.0
    %200 = vmatpush1.xpose.msra.mxu0 0.0
    %201 = vmatprep.subr.mxu0 0.0
    %202 = vmatpush1.xpose.msra.mxu0 0.0
    %203 = vmatprep.subr.mxu0 0.0
    %204 = vmatpush1.xpose.msra.mxu0 0.0
    %205 = vmatprep.subr.mxu0 0.0
    %206 = vmatpush1.xpose.msra.mxu0 0.0
    %207 = vmatprep.subr.mxu0 0.0
    %208 = vmatpush1.xpose.msra.mxu0 0.0
    %209 = vmatprep.subr.mxu0 0.0
    %210 = vmatpush1.xpose.msra.mxu0 0.0
    %211 = vmatprep.subr.mxu0 0.0
    %212 = vmatpush1.xpose.msra.mxu0 0.0
    %213 = vmatprep.subr.mxu0 0.0
    %214 = vmatpush1.xpose.msra.mxu0 0.0
    %215 = vmatprep.subr.mxu0 0.0
    %216 = vmatpush1.xpose.msra.mxu0 0.0
    %217 = vmatprep.subr.mxu0 0.0
    %218 = vmatpush1.xpose.msra.mxu0 0.0
    %219 = vmatprep.subr.mxu0 0.0
    %220 = vmatpush1.xpose.msra.mxu0 0.0
    %221 = vmatprep.subr.mxu0 0.0
    %222 = vmatpush1.xpose.msra.mxu0 0.0
    %223 = vmatprep.subr.mxu0 0.0
    %224 = vmatpush1.xpose.msra.mxu0 0.0
    %225 = vmatprep.subr.mxu0 0.0
    %226 = vmatpush1.xpose.msra.mxu0 0.0
    %227 = vmatprep.subr.mxu0 0.0
    %228 = vmatpush1.xpose.msra.mxu0 %v196
    %229 = vmatprep.subr.mxu0 0.0
    %230 = vmatpush2.xpose.msra.mxu0 0.0
    %231 = vmatprep.subr.mxu0 0.0
    %232 = vmatpush2.xpose.msra.mxu0 0.0
    %233 = vmatprep.subr.mxu0 0.0
    %234 = vmatpush2.xpose.msra.mxu0 0.0
    %235 = vmatprep.subr.mxu0 0.0
    %236 = vmatpush2.xpose.msra.mxu0 0.0
    %237 = vmatprep.subr.mxu0 0.0
    %238 = vmatpush2.xpose.msra.mxu0 0.0
    %239 = vmatprep.subr.mxu0 0.0
    %240 = vmatpush2.xpose.msra.mxu0 0.0
    %241 = vmatprep.subr.mxu0 0.0
    %242 = vmatpush2.xpose.msra.mxu0 0.0
    %243 = vmatprep.subr.mxu0 0.0
    %244 = vmatpush2.xpose.msra.mxu0 0.0
    %245 = vmatprep.subr.mxu0 0.0
    %246 = vmatpush2.xpose.msra.mxu0 0.0
    %247 = vmatprep.subr.mxu0 0.0
    %248 = vmatpush2.xpose.msra.mxu0 0.0
    %249 = vmatprep.subr.mxu0 0.0
    %250 = vmatpush2.xpose.msra.mxu0 0.0
    %251 = vmatprep.subr.mxu0 0.0
    %252 = vmatpush2.xpose.msra.mxu0 0.0
    %253 = vmatprep.subr.mxu0 0.0
    %254 = vmatpush2.xpose.msra.mxu0 0.0
    %255 = vmatprep.subr.mxu0 0.0
    %256 = vmatpush2.xpose.msra.mxu0 0.0
    %257 = vmatprep.subr.mxu0 0.0
    %258 = vmatpush2.xpose.msra.mxu0 0.0
    %259 = vmatprep.subr.mxu0 0.0
    %260 = vmatpush2.xpose.msra.mxu0 0.0
    %261 = vmatprep.mubr.f32.mxu0 0.0
    %262 = vmatmul.mubr.f32.gmra.mxu0 %v192
    %v263 = vpop.f32.mrf.mxu0
    %v264 = vadd.f32 0.0, %v263
    %v265 = vpop.f32.mrf.mxu0
    %266 = vdwg.mxu0
    %v267 = vld [vmem:[#allocation9] sm:$0xff]
    %268 = vmatprep.subr.mxu0 0.0
    %269 = vmatpush1.xpose.msra.mxu0 0.0
    %270 = vmatprep.subr.mxu0 0.0
    %271 = vmatpush1.xpose.msra.mxu0 0.0
    %272 = vmatprep.subr.mxu0 0.0
    %273 = vmatpush1.xpose.msra.mxu0 0.0
    %274 = vmatprep.subr.mxu0 0.0
    %275 = vmatpush1.xpose.msra.mxu0 0.0
    %276 = vmatprep.subr.mxu0 0.0
    %277 = vmatpush1.xpose.msra.mxu0 0.0
    %278 = vmatprep.subr.mxu0 0.0
    %279 = vmatpush1.xpose.msra.mxu0 0.0
    %280 = vmatprep.subr.mxu0 0.0
    %281 = vmatpush1.xpose.msra.mxu0 0.0
    %282 = vmatprep.subr.mxu0 0.0
    %283 = vmatpush1.xpose.msra.mxu0 0.0
    %284 = vmatprep.subr.mxu0 0.0
    %285 = vmatpush1.xpose.msra.mxu0 0.0
    %286 = vmatprep.subr.mxu0 0.0
    %287 = vmatpush1.xpose.msra.mxu0 0.0
    %288 = vmatprep.subr.mxu0 0.0
    %289 = vmatpush1.xpose.msra.mxu0 0.0
    %290 = vmatprep.subr.mxu0 0.0
    %291 = vmatpush1.xpose.msra.mxu0 0.0
    %292 = vmatprep.subr.mxu0 0.0
    %293 = vmatpush1.xpose.msra.mxu0 0.0
    %294 = vmatprep.subr.mxu0 0.0
    %295 = vmatpush1.xpose.msra.mxu0 0.0
    %296 = vmatprep.subr.mxu0 0.0
    %297 = vmatpush1.xpose.msra.mxu0 0.0
    %298 = vmatprep.subr.mxu0 0.0
    %299 = vmatpush1.xpose.msra.mxu0 %v267
    %300 = vmatprep.subr.mxu0 0.0
    %301 = vmatpush2.xpose.msra.mxu0 0.0
    %302 = vmatprep.subr.mxu0 0.0
    %303 = vmatpush2.xpose.msra.mxu0 0.0
    %304 = vmatprep.subr.mxu0 0.0
    %305 = vmatpush2.xpose.msra.mxu0 0.0
    %306 = vmatprep.subr.mxu0 0.0
    %307 = vmatpush2.xpose.msra.mxu0 0.0
    %308 = vmatprep.subr.mxu0 0.0
    %309 = vmatpush2.xpose.msra.mxu0 0.0
    %310 = vmatprep.subr.mxu0 0.0
    %311 = vmatpush2.xpose.msra.mxu0 0.0
    %312 = vmatprep.subr.mxu0 0.0
    %313 = vmatpush2.xpose.msra.mxu0 0.0
    %314 = vmatprep.subr.mxu0 0.0
    %315 = vmatpush2.xpose.msra.mxu0 0.0
    %316 = vmatprep.subr.mxu0 0.0
    %317 = vmatpush2.xpose.msra.mxu0 0.0
    %318 = vmatprep.subr.mxu0 0.0
    %319 = vmatpush2.xpose.msra.mxu0 0.0
    %320 = vmatprep.subr.mxu0 0.0
    %321 = vmatpush2.xpose.msra.mxu0 0.0
    %322 = vmatprep.subr.mxu0 0.0
    %323 = vmatpush2.xpose.msra.mxu0 0.0
    %324 = vmatprep.subr.mxu0 0.0
    %325 = vmatpush2.xpose.msra.mxu0 0.0
    %326 = vmatprep.subr.mxu0 0.0
    %327 = vmatpush2.xpose.msra.mxu0 0.0
    %328 = vmatprep.subr.mxu0 0.0
    %329 = vmatpush2.xpose.msra.mxu0 0.0
    %330 = vmatprep.subr.mxu0 0.0
    %331 = vmatpush2.xpose.msra.mxu0 0.0
    %332 = vmatprep.mubr.f32.mxu0 0.0
    %333 = vmatmul.mubr.f32.gmra.mxu0 %v192
    %v334 = vpop.f32.mrf.mxu0
    %v335 = vadd.f32 0.0, %v334
    %v336 = vpop.f32.mrf.mxu0
    %337 = vdwg.mxu0
    %v338 = vld [vmem:[#allocation2] sm:$0x1]
    %v340 = vlaneseq
    %v341 = vshrl.u32 %v340, 7
    %v342 = vsub.s32 0, %v341
    %v343 = vrot.slane %v338, %v342
    %v345 = vadd.f32 %v195, %v343
    %v346 = vmul.f32 %v264, 2.0
    %v347 = vsub.f32 %v345, %v346
    %v348 = vmax.f32 %v347, 0.0
    %v349 = vadd.f32 %v348, 1.28e-14
    %v350 = vld [vmem:[#allocation3] sm:$0x1]
    %v352 = vlaneseq
    %v353 = vshrl.u32 %v352, 7
    %v354 = vsub.s32 0, %v353
    %v355 = vrot.slane %v350, %v354
    %v357 = vadd.f32 %v195, %v355
    %v358 = vmul.f32 %v335, 2.0
    %v359 = vsub.f32 %v357, %v358
    %v360 = vmax.f32 %v359, 0.0
    %v361 = vadd.f32 %v360, 1.28e-14
    %v362 = vlaneseq
    %v363 = vand.u32 %v362, 127
    %v364 = vlaneseq
    %v365 = vshrl.u32 %v364, 7
    %v366 = vstv %s190
    %v367 = vadd.s32 %v365, %v366
    %vm368 = vcmp.eq.s32.totalorder %v363, %v367
    %v369 = vsel %vm368, 1.28e-14, %v349
    %v370 = vrsqrt.pop %v369
    %v371 = vmul.f32 %v369, %v370
    %vm372 = vcmp.eq.f32.partialorder %v369, inf
    %v373 = vsel %vm372, %v369, %v371
    %vm374 = vcmp.eq.f32.partialorder %v369, 0.0
    %v375 = vand.u32 %v369, 2147483648
    %v376 = vsel %vm374, %v375, %v373
    %v377 = vrsqrt.pop %v361
    %v378 = vmul.f32 %v361, %v377
    %vm379 = vcmp.eq.f32.partialorder %v361, inf
    %v380 = vsel %vm379, %v361, %v378
    %vm381 = vcmp.eq.f32.partialorder %v361, 0.0
    %v382 = vand.u32 %v361, 2147483648
    %v383 = vsel %vm381, %v382, %v380
    %vm384 = vcmask 64512
    %v385 = vsel %vm384, %v369, 0.0
    %386 = vadd.xlane.f32.xlu0 %v385
    %v387 = vpop.xlane.xlu0 %386
    %v388 = vrsqrt.pop %v387
    %v389 = vsel %vm384, %v361, 0.0
    %390 = vadd.xlane.f32.xlu0 %v389
    %v391 = vpop.xlane.xlu0 %390
    %v392 = vrsqrt.pop %v391
    %v393 = vmul.f32 %v383, %v392
    %v394 = vmul.f32 %v376, %v388
    %v395 = vld [vmem:[#allocation4] sm:$0xff]
    %v396 = vadd.f32 %v393, 0.0
    %v397 = vadd.f32 %v395, %v396
    %398 = vst.msk [vmem:[#allocation4] sm:$0xff] %vm384, %v397
    %v399 = vld [vmem:[#allocation5] sm:$0xff]
    %v400 = vadd.f32 %v394, 0.0
    %v401 = vadd.f32 %v399, %v400
    %402 = vst.msk [vmem:[#allocation5] sm:$0xff] %vm384, %v401
    // Predicated region
    $region22: #{tpu_custom_call.1} parent=1 // pred_check
      %p403 = pneg %p36
    $region23: #{tpu_custom_call.1} parent=1 // pred_check_branch
      %405 = sbr.rel (%p403) target = $region25
    $region24: #{tpu_custom_call.1} parent=1 // pred_region
      %v406 = vld [vmem:[#allocation4] sm:$0xff]
      %v407 = vsel %vm384, %v406, 0.0
      %v408 = vrot.slane %v407, 4
      %v409 = vadd.f32 %v407, %v408
      %v410 = vrot.slane %v409, 2
      %v411 = vadd.f32 %v409, %v410
      %v412 = vrot.slane %v411, 1
      %v413 = vadd.f32 %v411, %v412
      %v414 = vld [vmem:[#allocation5] sm:$0xff]
      %v415 = vsel %vm384, %v414, 0.0
      %v416 = vrot.slane %v415, 4
      %v417 = vadd.f32 %v415, %v416
      %v418 = vrot.slane %v417, 2
      %v419 = vadd.f32 %v417, %v418
      %v420 = vrot.slane %v419, 1
      %v421 = vadd.f32 %v419, %v420
      %v422 = vmul.f32 %v413, %v421
      %vm423 = vcmask 57344
      %v424 = vsel %vm423, %v422, 0.0
      %425 = vadd.xlane.f32.xlu0 %v424
      %v426 = vpop.xlane.xlu0 %425
      %v427 = vrot.slane %v426, 4
      %v428 = vadd.f32 %v426, %v427
      %v429 = vrot.slane %v428, 2
      %v430 = vadd.f32 %v428, %v429
      %v431 = vrot.slane %v430, 1
      %v432 = vadd.f32 %v430, %v431
      %s433 = vtos %v432
      %v434 = vstv %s433
      %v435 = vrcp.pop 64.0
      %v436 = vmul.f32 %v434, %v435
      %v437 = vsub.f32 1.0, %v436
      %v438 = vmax.f32 %v437, 0.0
      %vm439 = vcmask 0
      %440 = vst.msk [vmem:[#allocation11] sm:$0x1] %vm439, %v438
    $region25: #{tpu_custom_call.1} parent=1 // pred_fallthru
      _
    // Predicated region
    $region26: #{tpu_custom_call.1} parent=1 // pred_check
      _
    $region27: #{tpu_custom_call.1} parent=1 // pred_check_branch
      %442 = sbr.rel (0) target = $region29
    $region28: #{tpu_custom_call.1} parent=1 // pred_region
      %s444 = ssub.s32 16, 16
      %445 = vsyncadd [#allocation8], %s444
      %s447 = sshll.u32 [#allocation11], 4
      %s448 = int_to_ptr.vmem [resolvable:$true] %s447
      %450 = dma.vmem_to_hbm [thread:$0]  %s448, 16, %s2, [#allocation8]
    $region29: #{tpu_custom_call.1} parent=1 // pred_fallthru
      _
    // Predicated region
    $region30: #{tpu_custom_call.1} parent=1 // pred_check
      _
    $region31: #{tpu_custom_call.1} parent=1 // pred_check_branch
      %452 = sbr.rel (0) target = $region33
    $region32: #{tpu_custom_call.1} parent=1 // pred_region
      %453 = dma.done [#allocation8], 16
    $region33: #{tpu_custom_call.1} parent=1 // pred_fallthru
      _
    %454 = vsyncpa [#allocation7], 1
    %455 = vsyncpa [#allocation10], 1
    %456 = vsyncpa [#allocation8], 1

</llo_original>
